<compile_context>
chip_gen: v7x
topology: tpu7x:2x2x1
jax: 0.10.0
libtpu: 0.0.40
codegen_flags: <defaults>
</compile_context>

<pallas_src>
import functools

import jax
import jax.numpy as jnp
from jax import lax
from jax.experimental import pallas as pl
from jax.experimental.pallas import tpu as pltpu


# ---------------------------------------------------------------------------
# Pallas hot path: row-tiled GEMM + bias, full-lane (padded) Kd and N.
# ---------------------------------------------------------------------------
def _matmul_bias_kernel(p_ref, w_ref, b_ref, o_ref):
    # p_ref: (tm, Kd)   w_ref: (Kd, N)   b_ref: (1, N)   o_ref: (tm, N)  [f32 out]
    acc = jnp.dot(p_ref[...], w_ref[...], preferred_element_type=jnp.float32)
    o_ref[...] = (acc + b_ref[...]).astype(o_ref.dtype)


def _round_up(x, m):
    return (x + m - 1) // m * m


def _choose_tm(M, Kd, N, p_bytes, *, tm_max=1024, vmem_budget=24 << 20):
    """Pick the row tile: as big as the VMEM budget allows, >=2 grid steps."""
    tm = min(tm_max, _round_up(M, 128))
    fixed = 2 * Kd * N * p_bytes + 2 * N * 4           # W + bias (double-buffered)
    while tm > 128 and fixed + 2 * tm * (Kd * p_bytes + N * 4) > vmem_budget:
        tm //= 2
    # Keep the grid >= 2 steps when possible so both v7x TensorCores get work.
    if M > 128:
        tm = min(tm, _round_up((M + 1) // 2, 128))
    return max(128, tm)


def matmul_bias_pallas(p, w, b, *, tm):
    """p: [Mp, Kd], w: [Kd, N], b: [1, N] -> [Mp, N] (float32).

    Requires Mp % tm == 0 and Kd, N multiples of 128 (caller pads with zeros).
    """
    Mp, Kd = p.shape
    _, N = w.shape
    assert Mp % tm == 0 and Kd % 128 == 0 and N % 128 == 0

    cost = pl.CostEstimate(
        flops=2 * Mp * Kd * N,
        transcendentals=0,
        bytes_accessed=(Mp * Kd * p.dtype.itemsize + Kd * N * w.dtype.itemsize
                        + N * 4 + Mp * N * 4),
    )
    return pl.pallas_call(
        _matmul_bias_kernel,
        out_shape=jax.ShapeDtypeStruct((Mp, N), jnp.float32),
        grid_spec=pltpu.PrefetchScalarGridSpec(
            num_scalar_prefetch=0,
            grid=(Mp // tm,),
            in_specs=[
                pl.BlockSpec((tm, Kd), lambda i: (i, 0)),   # streamed row tiles
                pl.BlockSpec((Kd, N), lambda i: (0, 0)),    # resident weights
                pl.BlockSpec((1, N), lambda i: (0, 0)),     # resident bias
            ],
            out_specs=pl.BlockSpec((tm, N), lambda i: (i, 0)),
        ),
        compiler_params=pltpu.CompilerParams(
            dimension_semantics=("parallel",),
            vmem_limit_bytes=32 << 20,
        ),
        cost_estimate=cost,
    )(p, w, b)


# ---------------------------------------------------------------------------
# ComplexConvTranspose2d forward.
# ---------------------------------------------------------------------------
def complex_conv_transpose2d(x, w_re, w_im, b_re, b_im, *, stride=1, padding=0,
                             output_padding=0, dilation=1, compute_dtype=None):
    """x: [B, Cin, H, W, 2]; w_*: [Cin, Cout, K, K]; b_*: [Cout].
    Returns [B, Cout, Hout, Wout, 2]."""
    B, Cin, H, W, _ = x.shape
    _, Cout, K, _ = w_re.shape
    s, p, op, d = stride, padding, output_padding, dilation
    Hout = (H - 1) * s - 2 * p + d * (K - 1) + op + 1
    Wout = (W - 1) * s - 2 * p + d * (K - 1) + op + 1

    pad_lo = d * (K - 1) - p
    pad_hi = d * (K - 1) - p + op
    assert pad_lo >= 0, "padding > dilation*(K-1) not supported in this demo"

    in_dtype = jnp.dtype(compute_dtype) if compute_dtype is not None else jnp.dtype(x.dtype)

    # --- glue: channels-last, zero-dilate by stride, pad (tconv -> conv) -----
    x_cl = jnp.transpose(x, (0, 2, 3, 4, 1)).astype(in_dtype)      # [B,H,W,2,Cin]
    Hd, Wd = (H - 1) * s + 1, (W - 1) * s + 1
    x_dil = jnp.zeros((B, Hd, Wd, 2, Cin), in_dtype).at[:, ::s, ::s].set(x_cl)
    x_pad = jnp.pad(x_dil, ((0, 0), (pad_lo, pad_hi), (pad_lo, pad_hi),
                            (0, 0), (0, 0)))

    # --- glue: im2col (K*K static slices, already in P-row feature order) ----
    cols = [x_pad[:, kh * d:kh * d + Hout, kw * d:kw * d + Wout]
            for kh in range(K) for kw in range(K)]
    patches = jnp.stack(cols, axis=-1)                 # [B,Ho,Wo,2,Cin,K*K]

    M = B * Hout * Wout
    Kf = Cin * K * K
    Kd_raw = 2 * Kf
    Kd = _round_up(Kd_raw, 128)                        # lane-dense loads
    N = _round_up(2 * Cout, 128)                       # lane-dense (unmasked) stores
    tm = _choose_tm(M, Kd, N, in_dtype.itemsize)
    Mp = _round_up(M, tm)

    # Zero-pad rows (M->Mp) and features (Kd_raw->Kd); exact, fuses with im2col.
    P = jnp.pad(patches.reshape(M, Kd_raw), ((0, Mp - M), (0, Kd - Kd_raw)))

    # --- glue: block-complex weights (flipped kernel, IO->OI), padded --------
    w_re_f = w_re[:, :, ::-1, ::-1]                    # [Cin,Cout,K,K]
    w_im_f = w_im[:, :, ::-1, ::-1]
    Wre = jnp.transpose(w_re_f, (0, 2, 3, 1)).reshape(Kf, Cout)
    Wim = jnp.transpose(w_im_f, (0, 2, 3, 1)).reshape(Kf, Cout)
    # [P_re, P_im] @ [[Wre, Wim], [-Wim, Wre]] = [real, imag]
    W_cat = jnp.concatenate(
        [jnp.concatenate([Wre, Wim], axis=1),
         jnp.concatenate([-Wim, Wre], axis=1)], axis=0)            # [2Kf, 2Cout]
    W_cat = jnp.pad(W_cat, ((0, Kd - Kd_raw), (0, N - 2 * Cout))).astype(in_dtype)
    b_cat = jnp.pad(jnp.concatenate([b_re - b_im, b_re + b_im]),
                    (0, N - 2 * Cout))[None, :].astype(jnp.float32)  # [1, N]

    # --- Pallas hot path ------------------------------------------------------
    out_flat = matmul_bias_pallas(P, W_cat, b_cat, tm=tm)          # [Mp, N] f32

    # Slice + reshape + transpose to the module's output layout (single fused
    # XLA copy; the NCHW+complex layout is required by the module semantics).
    out = out_flat[:M, :2 * Cout].reshape(B, Hout, Wout, 2, Cout)
    out = jnp.transpose(out, (0, 4, 1, 2, 3)).astype(x.dtype)      # [B,Cout,Ho,Wo,2]
    return out


# ---------------------------------------------------------------------------
# Pure-JAX reference (lax conv with lhs_dilation == ConvTranspose2d).
# ---------------------------------------------------------------------------
def _tconv_ref(xs, w, b, *, stride, padding, output_padding, dilation):
    K = w.shape[-1]
    d, p, op = dilation, padding, output_padding
    w_oi = jnp.transpose(w[:, :, ::-1, ::-1], (1, 0, 2, 3))        # [Cout,Cin,K,K]
    y = lax.conv_general_dilated(
        xs, w_oi, window_strides=(1, 1),
        padding=[(d * (K - 1) - p, d * (K - 1) - p + op)] * 2,
        lhs_dilation=(stride, stride), rhs_dilation=(d, d),
        dimension_numbers=("NCHW", "OIHW", "NCHW"))
    return y + b[None, :, None, None]


def complex_conv_transpose2d_ref(x, w_re, w_im, b_re, b_im, **kw):
    xr, xi = x[..., 0], x[..., 1]
    real = _tconv_ref(xr, w_re, b_re, **kw) - _tconv_ref(xi, w_im, b_im, **kw)
    imag = _tconv_ref(xi, w_re, b_re, **kw) + _tconv_ref(xr, w_im, b_im, **kw)
    return jnp.stack((real, imag), axis=-1)


# ---------------------------------------------------------------------------
if __name__ == "__main__":
    key = jax.random.PRNGKey(0)
    B, Cin, Cout, H, W, K = 2, 4, 4, 8, 8, 3
    stride, padding, output_padding, dilation = 2, 1, 1, 1

    k_x, k_wr, k_wi, k_br, k_bi = jax.random.split(key, 5)
    x = jax.random.normal(k_x, (B, Cin, H, W, 2), jnp.float32)
    w_re = jax.random.normal(k_wr, (Cin, Cout, K, K), jnp.float32) * 0.1
    w_im = jax.random.normal(k_wi, (Cin, Cout, K, K), jnp.float32) * 0.1
    b_re = jax.random.normal(k_br, (Cout,), jnp.float32) * 0.1
    b_im = jax.random.normal(k_bi, (Cout,), jnp.float32) * 0.1

    ref = complex_conv_transpose2d_ref(
        x, w_re, w_im, b_re, b_im, stride=stride, padding=padding,
        output_padding=output_padding, dilation=dilation)

    # f32 path (exact w.r.t. reference).
    fwd = jax.jit(functools.partial(
        complex_conv_transpose2d, stride=stride, padding=padding,
        output_padding=output_padding, dilation=dilation))
    out = jax.block_until_ready(fwd(x, w_re, w_im, b_re, b_im))
    assert out.shape == ref.shape, (out.shape, ref.shape)
    assert jnp.allclose(out, ref, atol=1e-4, rtol=1e-4), \
        float(jnp.max(jnp.abs(out - ref)))

    # bf16 MXU path (f32 accumulation) — looser tolerance.
    fwd_bf16 = jax.jit(functools.partial(
        complex_conv_transpose2d, stride=stride, padding=padding,
        output_padding=output_padding, dilation=dilation,
        compute_dtype=jnp.bfloat16))
    out_bf16 = jax.block_until_ready(fwd_bf16(x, w_re, w_im, b_re, b_im))
    assert out_bf16.shape == ref.shape
    assert jnp.allclose(out_bf16, ref, atol=5e-2, rtol=5e-2), \
        float(jnp.max(jnp.abs(out_bf16 - ref)))

    print("KERNEL_OK")
</pallas_src>

<mosaic_0001>
module attributes {stable_mosaic.version = 11 : i64} {
  func.func @_matmul_bias_kernel(%arg0: i32, %arg1: memref<256x128xf32, #tpu.memory_space<vmem>>, %arg2: memref<128x128xf32, #tpu.memory_space<vmem>>, %arg3: memref<1x128xf32, #tpu.memory_space<vmem>>, %arg4: memref<256x128xf32, #tpu.memory_space<vmem>>) attributes {dimension_semantics = [#tpu.dimension_semantics<parallel>], iteration_bounds = array<i64: 2>, scalar_prefetch = 0 : i64, scratch_operands = 0 : i64, tpu.core_type = #tpu.core_type<tc>, window_params = [{transform_indices = @transform_0, window_bounds = array<i64: 256, 128>}, {pipeline_mode = #tpu.pipeline_mode<synchronous>, transform_indices = @transform_1, window_bounds = array<i64: 128, 128>}, {pipeline_mode = #tpu.pipeline_mode<synchronous>, transform_indices = @transform_2, window_bounds = array<i64: 1, 128>}, {transform_indices = @transform_3, window_bounds = array<i64: 256, 128>}]} {
    %c0 = arith.constant 0 : index
    %c0_0 = arith.constant 0 : index
    %0 = vector.load %arg1[%c0, %c0_0] : memref<256x128xf32, #tpu.memory_space<vmem>>, vector<256x128xf32>
    %c0_1 = arith.constant 0 : index
    %c0_2 = arith.constant 0 : index
    %1 = vector.load %arg2[%c0_1, %c0_2] : memref<128x128xf32, #tpu.memory_space<vmem>>, vector<128x128xf32>
    %cst = arith.constant dense<0.000000e+00> : vector<256x128xf32>
    %2 = tpu.matmul %0, %1, %cst {dimension_numbers = #tpu.dot_dimension_numbers<[1], [0], [0], [1], [0, 0, 1, 1], [], []>} : vector<256x128xf32>, vector<128x128xf32>, vector<256x128xf32> -> vector<256x128xf32>
    %c0_3 = arith.constant 0 : index
    %c0_4 = arith.constant 0 : index
    %3 = vector.load %arg3[%c0_3, %c0_4] : memref<1x128xf32, #tpu.memory_space<vmem>>, vector<1x128xf32>
    %4 = vector.broadcast %3 : vector<1x128xf32> to vector<256x128xf32>
    %5 = arith.addf %2, %4 : vector<256x128xf32>
    %c0_5 = arith.constant 0 : index
    %c0_6 = arith.constant 0 : index
    %6 = vector.load %arg4[%c0_5, %c0_6] : memref<256x128xf32, #tpu.memory_space<vmem>>, vector<256x128xf32>
    tpu.vector_store %arg4[%c0_5, %c0_6], %5 {strides = array<i32>} : memref<256x128xf32, #tpu.memory_space<vmem>>, vector<256x128xf32>,
    return
  }
  func.func @transform_0(%arg0: i32) -> (i32, i32) {
    %c0_i32 = arith.constant 0 : i32
    %c0_i32_0 = arith.constant 0 : i32
    return %arg0, %c0_i32 : i32, i32
  }
  func.func @transform_1(%arg0: i32) -> (i32, i32) {
    %c0_i32 = arith.constant 0 : i32
    %c0_i32_0 = arith.constant 0 : i32
    %c0_i32_1 = arith.constant 0 : i32
    return %c0_i32, %c0_i32_0 : i32, i32
  }
  func.func @transform_2(%arg0: i32) -> (i32, i32) {
    %c0_i32 = arith.constant 0 : i32
    %c0_i32_0 = arith.constant 0 : i32
    %c0_i32_1 = arith.constant 0 : i32
    return %c0_i32, %c0_i32_0 : i32, i32
  }
  func.func @transform_3(%arg0: i32) -> (i32, i32) {
    %c0_i32 = arith.constant 0 : i32
    %c0_i32_0 = arith.constant 0 : i32
    return %arg0, %c0_i32 : i32, i32
  }
}

</mosaic_0001>

<llo_original>
// kernel: neg.1
$region0: #{neg.1}
  #allocation0 [shape = 's32[1]{0}', space=sflag, size = 0x4, scoped, tag = 'scoped memory for neg.1']
  %s0 = inlined_call_operand.vmem [shape: f32[36,4], index: 0, kind: input, shape index: {}]
  %s1 = inlined_call_operand.vmem [shape: f32[36,4], index: 1, kind: output, shape index: {}]
  %v2 = vld [vmem:[%s0] sm:$0xf]
  %3 = xla_tuple %v2
  %4 = xla_tuple %3
  %v5 = vxor.u32 %v2, 2147483648
  %6 = xla_tuple %v5
  %7 = vst [vmem:[%s1] sm:$0xf] %v5

// kernel: complex_conv_transpose2d.1
$region0: #{complex_conv_transpose2d.1}
  #allocation0 [shape = 'u32[]', space=smem, size = 0x4, offset = 0x4, fixed_abs, tag = 'smem constant byte address 0x4 - core index']
  #allocation1 [shape = 'u32[144,128]{1,0:T(1,128)}', space=vmem, size = 0x12000, scoped, tag = 'internal scratch']
  %s0 = inlined_call_operand.vmem [shape: f32[512,128], index: 0, kind: input, shape index: {}]
  %s1 = inlined_call_operand.vmem [shape: f32[128,128], index: 1, kind: input, shape index: {}]
  %s2 = inlined_call_operand.vmem [shape: f32[1,128], index: 2, kind: input, shape index: {}]
  %s3 = inlined_call_operand.vmem [shape: f32[512,128], index: 3, kind: output, shape index: {}]
  %s4 = sld [smem:[#allocation0]]
  $region45: #{complex_conv_transpose2d.1} parent=0
    _
  %s6 = ssub.s32 1, %s4
  %s7 = scalar_select 0, %s6, %s4
  loop: start=0, step=1, limit=4
  $region2: #{complex_conv_transpose2d.1} parent=0 // loop_pre_header
    _
  $region3: #{complex_conv_transpose2d.1} parent=0 // loop_header
    %s9 = sphi 0, %s13
    %p10 = scmp.ge.s32.totalorder %s9, 4
    %s19 = sphi 0, %s21
    %s22 = sphi 0, %s19
    %s23 = sphi 0, %s22
    %s39 = sphi 0, %s23
    %s43 = sphi 0, %s43
    %s45 = sphi 0, %s43
    %s46 = sphi 0, %s45
    %s60 = sphi 0, %s46
    %s64 = sphi 0, %s64
    %s66 = sphi 0, %s64
    %s67 = sphi 0, %s66
    %s81 = sphi 0, %s67
    %s87 = sphi 0, %s89
    %s90 = sphi 0, %s87
    %s91 = sphi 0, %s90
    %s107 = sphi 0, %s91
  $region4: #{complex_conv_transpose2d.1} parent=0 // loop_header_branch
    %12 = sbr.rel (%p10) target = $region8
  $region5: #{complex_conv_transpose2d.1} parent=0 // loop_body
    %s14 = ssub.s32 %s9, 1
    %s15 = ssub.s32 %s9, 2
    %s16 = sadd.s32 %s9, 1
    %s17 = ssub.s32 %s9, %s16
    %p18 = scmp.eq.s32.totalorder %s17, 0
    %s20 = sadd.s32 %s19, 1
    %s21 = scalar_select %p18, %s19, %s20
    %p24 = pneg %p18
    %p25 = scmp.eq.s32.totalorder %s9, 1
    %p26 = por %p24, %p25
    %p27 = scmp.ne.s32.totalorder %s19, %s22
    %p28 = scmp.eq.s32.totalorder %s9, 0
    %p29 = por %p27, %p28
    %p30 = scmp.ne.s32.totalorder %s19, %s22
    %p31 = scmp.eq.s32.totalorder %s14, 1
    %p32 = por %p30, %p31
    %p33 = scmp.ne.s32.totalorder %s22, %s23
    %p34 = scmp.eq.s32.totalorder %s14, 0
    %p35 = por %p33, %p34
    %p36 = scmp.ne.s32.totalorder %s22, %s23
    %p37 = scmp.eq.s32.totalorder %s15, 1
    %p38 = por %p36, %p37
    %p40 = scmp.ne.s32.totalorder %s23, %s39
    %p41 = scmp.eq.s32.totalorder %s15, 0
    %p42 = por %p40, %p41
    %s44 = sadd.s32 %s43, 1
    %p47 = scmp.eq.s32.totalorder %s9, 1
    %p48 = scmp.ne.s32.totalorder %s43, %s45
    %p49 = scmp.eq.s32.totalorder %s9, 0
    %p50 = por %p48, %p49
    %p51 = scmp.ne.s32.totalorder %s43, %s45
    %p52 = scmp.eq.s32.totalorder %s14, 1
    %p53 = por %p51, %p52
    %p54 = scmp.ne.s32.totalorder %s45, %s46
    %p55 = scmp.eq.s32.totalorder %s14, 0
    %p56 = por %p54, %p55
    %p57 = scmp.ne.s32.totalorder %s45, %s46
    %p58 = scmp.eq.s32.totalorder %s15, 1
    %p59 = por %p57, %p58
    %p61 = scmp.ne.s32.totalorder %s46, %s60
    %p62 = scmp.eq.s32.totalorder %s15, 0
    %p63 = por %p61, %p62
    %s65 = sadd.s32 %s64, 1
    %p68 = scmp.eq.s32.totalorder %s9, 1
    %p69 = scmp.ne.s32.totalorder %s64, %s66
    %p70 = scmp.eq.s32.totalorder %s9, 0
    %p71 = por %p69, %p70
    %p72 = scmp.ne.s32.totalorder %s64, %s66
    %p73 = scmp.eq.s32.totalorder %s14, 1
    %p74 = por %p72, %p73
    %p75 = scmp.ne.s32.totalorder %s66, %s67
    %p76 = scmp.eq.s32.totalorder %s14, 0
    %p77 = por %p75, %p76
    %p78 = scmp.ne.s32.totalorder %s66, %s67
    %p79 = scmp.eq.s32.totalorder %s15, 1
    %p80 = por %p78, %p79
    %p82 = scmp.ne.s32.totalorder %s67, %s81
    %p83 = scmp.eq.s32.totalorder %s15, 0
    %p84 = por %p82, %p83
    %s85 = ssub.s32 %s9, %s16
    %p86 = scmp.eq.s32.totalorder %s85, 0
    %s88 = sadd.s32 %s87, 1
    %s89 = scalar_select %p86, %s87, %s88
    %p92 = pneg %p86
    %p93 = scmp.eq.s32.totalorder %s9, 1
    %p94 = por %p92, %p93
    %p95 = scmp.ne.s32.totalorder %s87, %s90
    %p96 = scmp.eq.s32.totalorder %s9, 0
    %p97 = por %p95, %p96
    %p98 = scmp.ne.s32.totalorder %s87, %s90
    %p99 = scmp.eq.s32.totalorder %s14, 1
    %p100 = por %p98, %p99
    %p101 = scmp.ne.s32.totalorder %s90, %s91
    %p102 = scmp.eq.s32.totalorder %s14, 0
    %p103 = por %p101, %p102
    %p104 = scmp.ne.s32.totalorder %s90, %s91
    %p105 = scmp.eq.s32.totalorder %s15, 1
    %p106 = por %p104, %p105
    %p108 = scmp.ne.s32.totalorder %s91, %s107
    %p109 = scmp.eq.s32.totalorder %s15, 0
    %p110 = por %p108, %p109
    %p111 = scmp.le.s32.totalorder 1, %s9
    %p112 = scmp.lt.s32.totalorder %s9, 3
    %p113 = pnand %p111, %p112
    %p114 = pneg %p113
    // Predicated region
    $region9: #{complex_conv_transpose2d.1} parent=5 // pred_check
      _
    $region10: #{complex_conv_transpose2d.1} parent=5 // pred_check_branch
      %116 = sbr.rel (%p113) target = $region12
    $region11: #{complex_conv_transpose2d.1} parent=5 // pred_region
      %s117 = ssub.s32 %s9, 1
      // Predicated region
      $region13: #{complex_conv_transpose2d.1} parent=11 // pred_check
        %p118 = pneg %p56
      $region14: #{complex_conv_transpose2d.1} parent=11 // pred_check_branch
        %120 = sbr.rel (%p118) target = $region16
      $region15: #{complex_conv_transpose2d.1} parent=11 // pred_region
        _
      $region16: #{complex_conv_transpose2d.1} parent=11 // pred_fallthru
        _
      // Predicated region
      $region17: #{complex_conv_transpose2d.1} parent=11 // pred_check
        %p121 = pneg %p77
      $region18: #{complex_conv_transpose2d.1} parent=11 // pred_check_branch
        %123 = sbr.rel (%p121) target = $region20
      $region19: #{complex_conv_transpose2d.1} parent=11 // pred_region
        _
      $region20: #{complex_conv_transpose2d.1} parent=11 // pred_fallthru
        _
    $region12: #{complex_conv_transpose2d.1} parent=5 // pred_fallthru
      _
    %p124 = scmp.lt.s32.totalorder %s9, 2
    // Predicated region
    $region21: #{complex_conv_transpose2d.1} parent=5 // pred_check
      %p125 = pneg %p124
    $region22: #{complex_conv_transpose2d.1} parent=5 // pred_check_branch
      %127 = sbr.rel (%p125) target = $region24
    $region23: #{complex_conv_transpose2d.1} parent=5 // pred_region
      // Predicated region
      $region25: #{complex_conv_transpose2d.1} parent=23 // pred_check
        %p128 = pneg %p29
      $region26: #{complex_conv_transpose2d.1} parent=23 // pred_check_branch
        %130 = sbr.rel (%p128) target = $region28
      $region27: #{complex_conv_transpose2d.1} parent=23 // pred_region
        %s131 = smul.u32 32, %s9
        %p132 = scmp.lt.s32.totalorder %s131, 63
        %s133 = scalar_select %p132, %s131, 63
        %s134 = smul.addr %s133, 8
        %s135 = scalar_lea.vmem %s0, %s134
        %s136 = smul.u32 32, %s9
      $region28: #{complex_conv_transpose2d.1} parent=23 // pred_fallthru
        _
    $region24: #{complex_conv_transpose2d.1} parent=5 // pred_fallthru
      _
    %p137 = scmp.le.s32.totalorder 1, %s9
    %p138 = scmp.lt.s32.totalorder %s9, 3
    %p139 = pnand %p137, %p138
    %p140 = pneg %p139
    // Predicated region
    $region29: #{complex_conv_transpose2d.1} parent=5 // pred_check
      _
    $region30: #{complex_conv_transpose2d.1} parent=5 // pred_check_branch
      %142 = sbr.rel (%p139) target = $region32
    $region31: #{complex_conv_transpose2d.1} parent=5 // pred_region
      %s143 = ssub.s32 %s9, 1
      %s144 = smul.u32 32, %s14
      %p145 = scmp.lt.s32.totalorder %s144, 63
      %s146 = scalar_select %p145, %s144, 63
      %s147 = smul.addr %s146, 8
      %s148 = scalar_lea.vmem %s0, %s147
      %p149 = pneg %p35
      %p150 = pneg %p32
      %p151 = pneg %p56
      %p152 = pneg %p53
      %p153 = pneg %p77
      %p154 = pneg %p74
      %p155 = pneg %p103
      %p156 = pneg %p100
      %s157 = smul.u32 32, %s14
      %p158 = scmp.lt.s32.totalorder %s157, 63
      %s159 = scalar_select %p158, %s157, 63
      %s160 = smul.addr %s159, 8
      %s161 = scalar_lea.vmem %s3, %s160
      %s162 = smul.u32 32, %s14
      %p163 = scmp.lt.s32.totalorder %s162, 63
      %s164 = scalar_select %p163, %s162, 63
      %s165 = smul.addr %s164, 8
      %s166 = scalar_lea.vmem %s0, %s165
      %s167 = smul.u32 32, %s14
      %s168 = smul.u32 32, %s14
      %p169 = scmp.lt.s32.totalorder %s168, 63
      %s170 = scalar_select %p169, %s168, 63
      %s171 = smul.addr %s170, 8
      %s172 = scalar_lea.vmem %s3, %s171
      %s173 = smul.u32 32, %s14
      %v174 = vld [vmem:[%s166] sm:$0xff]
      %v175 = vld [vmem:[%s166 + $0x8] sm:$0xff]
      %v176 = vld [vmem:[%s166 + $0x10] sm:$0xff]
      %v177 = vld [vmem:[%s166 + $0x18] sm:$0xff]
      %v178 = vld [vmem:[%s166 + $0x20] sm:$0xff]
      %v179 = vld [vmem:[%s166 + $0x28] sm:$0xff]
      %v180 = vld [vmem:[%s166 + $0x30] sm:$0xff]
      %v181 = vld [vmem:[%s166 + $0x38] sm:$0xff]
      %v182 = vld [vmem:[%s166 + $0x40] sm:$0xff]
      %v183 = vld [vmem:[%s166 + $0x48] sm:$0xff]
      %v184 = vld [vmem:[%s166 + $0x50] sm:$0xff]
      %v185 = vld [vmem:[%s166 + $0x58] sm:$0xff]
      %v186 = vld [vmem:[%s166 + $0x60] sm:$0xff]
      %v187 = vld [vmem:[%s166 + $0x68] sm:$0xff]
      %v188 = vld [vmem:[%s166 + $0x70] sm:$0xff]
      %v189 = vld [vmem:[%s166 + $0x78] sm:$0xff]
      %v190 = vld [vmem:[%s166 + $0x80] sm:$0xff]
      %v191 = vld [vmem:[%s166 + $0x88] sm:$0xff]
      %v192 = vld [vmem:[%s166 + $0x90] sm:$0xff]
      %v193 = vld [vmem:[%s166 + $0x98] sm:$0xff]
      %v194 = vld [vmem:[%s166 + $0xa0] sm:$0xff]
      %v195 = vld [vmem:[%s166 + $0xa8] sm:$0xff]
      %v196 = vld [vmem:[%s166 + $0xb0] sm:$0xff]
      %v197 = vld [vmem:[%s166 + $0xb8] sm:$0xff]
      %v198 = vld [vmem:[%s166 + $0xc0] sm:$0xff]
      %v199 = vld [vmem:[%s166 + $0xc8] sm:$0xff]
      %v200 = vld [vmem:[%s166 + $0xd0] sm:$0xff]
      %v201 = vld [vmem:[%s166 + $0xd8] sm:$0xff]
      %v202 = vld [vmem:[%s166 + $0xe0] sm:$0xff]
      %v203 = vld [vmem:[%s166 + $0xe8] sm:$0xff]
      %v204 = vld [vmem:[%s166 + $0xf0] sm:$0xff]
      %v205 = vld [vmem:[%s166 + $0xf8] sm:$0xff]
      %v206 = vld [vmem:[%s1] sm:$0xff]
      %v207 = vld [vmem:[%s1 + $0x8] sm:$0xff]
      %v208 = vld [vmem:[%s1 + $0x10] sm:$0xff]
      %v209 = vld [vmem:[%s1 + $0x18] sm:$0xff]
      %v210 = vld [vmem:[%s1 + $0x20] sm:$0xff]
      %v211 = vld [vmem:[%s1 + $0x28] sm:$0xff]
      %v212 = vld [vmem:[%s1 + $0x30] sm:$0xff]
      %v213 = vld [vmem:[%s1 + $0x38] sm:$0xff]
      %v214 = vld [vmem:[%s1 + $0x40] sm:$0xff]
      %v215 = vld [vmem:[%s1 + $0x48] sm:$0xff]
      %v216 = vld [vmem:[%s1 + $0x50] sm:$0xff]
      %v217 = vld [vmem:[%s1 + $0x58] sm:$0xff]
      %v218 = vld [vmem:[%s1 + $0x60] sm:$0xff]
      %v219 = vld [vmem:[%s1 + $0x68] sm:$0xff]
      %v220 = vld [vmem:[%s1 + $0x70] sm:$0xff]
      %v221 = vld [vmem:[%s1 + $0x78] sm:$0xff]
      %v222 = vld [vmem:[%s2] sm:$0x1]
      %v224 = vlaneseq
      %v225 = vshrl.u32 %v224, 7
      %v226 = vsub.s32 0, %v225
      %v227 = vrot.slane %v222, %v226
      %229 = vmatprep.subr.mxu0 0.0
      %230 = vmatpush1.msra.mxu0 %v206
      %231 = vmatprep.subr.mxu0 0.0
      %232 = vmatpush1.msra.mxu0 %v207
      %233 = vmatprep.subr.mxu0 0.0
      %234 = vmatpush1.msra.mxu0 %v208
      %235 = vmatprep.subr.mxu0 0.0
      %236 = vmatpush1.msra.mxu0 %v209
      %237 = vmatprep.subr.mxu0 0.0
      %238 = vmatpush1.msra.mxu0 %v210
      %239 = vmatprep.subr.mxu0 0.0
      %240 = vmatpush1.msra.mxu0 %v211
      %241 = vmatprep.subr.mxu0 0.0
      %242 = vmatpush1.msra.mxu0 %v212
      %243 = vmatprep.subr.mxu0 0.0
      %244 = vmatpush1.msra.mxu0 %v213
      %245 = vmatprep.subr.mxu0 0.0
      %246 = vmatpush1.msra.mxu0 %v214
      %247 = vmatprep.subr.mxu0 0.0
      %248 = vmatpush1.msra.mxu0 %v215
      %249 = vmatprep.subr.mxu0 0.0
      %250 = vmatpush1.msra.mxu0 %v216
      %251 = vmatprep.subr.mxu0 0.0
      %252 = vmatpush1.msra.mxu0 %v217
      %253 = vmatprep.subr.mxu0 0.0
      %254 = vmatpush1.msra.mxu0 %v218
      %255 = vmatprep.subr.mxu0 0.0
      %256 = vmatpush1.msra.mxu0 %v219
      %257 = vmatprep.subr.mxu0 0.0
      %258 = vmatpush1.msra.mxu0 %v220
      %259 = vmatprep.subr.mxu0 0.0
      %260 = vmatpush1.msra.mxu0 %v221
      %261 = vmatprep.subr.mxu0 0.0
      %262 = vmatpush1.msra.mxu0 0.0
      %263 = vmatprep.subr.mxu0 0.0
      %264 = vmatpush1.msra.mxu0 0.0
      %265 = vmatprep.subr.mxu0 0.0
      %266 = vmatpush1.msra.mxu0 0.0
      %267 = vmatprep.subr.mxu0 0.0
      %268 = vmatpush1.msra.mxu0 0.0
      %269 = vmatprep.subr.mxu0 0.0
      %270 = vmatpush1.msra.mxu0 0.0
      %271 = vmatprep.subr.mxu0 0.0
      %272 = vmatpush1.msra.mxu0 0.0
      %273 = vmatprep.subr.mxu0 0.0
      %274 = vmatpush1.msra.mxu0 0.0
      %275 = vmatprep.subr.mxu0 0.0
      %276 = vmatpush1.msra.mxu0 0.0
      %277 = vmatprep.subr.mxu0 0.0
      %278 = vmatpush1.msra.mxu0 0.0
      %279 = vmatprep.subr.mxu0 0.0
      %280 = vmatpush1.msra.mxu0 0.0
      %281 = vmatprep.subr.mxu0 0.0
      %282 = vmatpush1.msra.mxu0 0.0
      %283 = vmatprep.subr.mxu0 0.0
      %284 = vmatpush1.msra.mxu0 0.0
      %285 = vmatprep.subr.mxu0 0.0
      %286 = vmatpush1.msra.mxu0 0.0
      %287 = vmatprep.subr.mxu0 0.0
      %288 = vmatpush1.msra.mxu0 0.0
      %289 = vmatprep.subr.mxu0 0.0
      %290 = vmatpush1.msra.mxu0 0.0
      %291 = vmatprep.subr.mxu0 0.0
      %292 = vmatpush1.msra.mxu0 0.0
      %293 = vmatprep.mubr.f32.mxu0 0.0
      %294 = vmatmul.mubr.f32.gmra.mrb[0].mxu0 %v174
      %v295 = vpop.f32.mrb[0].mxu0
      %v296 = vadd.f32 %v227, %v295
      %v297 = vpop.f32.mrb[0].mxu0
      %298 = vmatprep.mubr.f32.mxu0 0.0
      %299 = vmatmul.mubr.f32.gmra.mrb[0].mxu0 %v175
      %v300 = vpop.f32.mrb[0].mxu0
      %v301 = vadd.f32 %v227, %v300
      %v302 = vpop.f32.mrb[0].mxu0
      %303 = vmatprep.mubr.f32.mxu0 0.0
      %304 = vmatmul.mubr.f32.gmra.mrb[0].mxu0 %v176
      %v305 = vpop.f32.mrb[0].mxu0
      %v306 = vadd.f32 %v227, %v305
      %v307 = vpop.f32.mrb[0].mxu0
      %308 = vmatprep.mubr.f32.mxu0 0.0
      %309 = vmatmul.mubr.f32.gmra.mrb[0].mxu0 %v177
      %v310 = vpop.f32.mrb[0].mxu0
      %v311 = vadd.f32 %v227, %v310
      %v312 = vpop.f32.mrb[0].mxu0
      %313 = vmatprep.mubr.f32.mxu0 0.0
      %314 = vmatmul.mubr.f32.gmra.mrb[0].mxu0 %v178
      %v315 = vpop.f32.mrb[0].mxu0
      %v316 = vadd.f32 %v227, %v315
      %v317 = vpop.f32.mrb[0].mxu0
      %318 = vmatprep.mubr.f32.mxu0 0.0
      %319 = vmatmul.mubr.f32.gmra.mrb[0].mxu0 %v179
      %v320 = vpop.f32.mrb[0].mxu0
      %v321 = vadd.f32 %v227, %v320
      %v322 = vpop.f32.mrb[0].mxu0
      %323 = vmatprep.mubr.f32.mxu0 0.0
      %324 = vmatmul.mubr.f32.gmra.mrb[0].mxu0 %v180
      %v325 = vpop.f32.mrb[0].mxu0
      %v326 = vadd.f32 %v227, %v325
      %v327 = vpop.f32.mrb[0].mxu0
      %328 = vmatprep.mubr.f32.mxu0 0.0
      %329 = vmatmul.mubr.f32.gmra.mrb[0].mxu0 %v181
      %v330 = vpop.f32.mrb[0].mxu0
      %v331 = vadd.f32 %v227, %v330
      %v332 = vpop.f32.mrb[0].mxu0
      %333 = vmatprep.mubr.f32.mxu0 0.0
      %334 = vmatmul.mubr.f32.gmra.mrb[0].mxu0 %v182
      %v335 = vpop.f32.mrb[0].mxu0
      %v336 = vadd.f32 %v227, %v335
      %v337 = vpop.f32.mrb[0].mxu0
      %338 = vmatprep.mubr.f32.mxu0 0.0
      %339 = vmatmul.mubr.f32.gmra.mrb[0].mxu0 %v183
      %v340 = vpop.f32.mrb[0].mxu0
      %v341 = vadd.f32 %v227, %v340
      %v342 = vpop.f32.mrb[0].mxu0
      %343 = vmatprep.mubr.f32.mxu0 0.0
      %344 = vmatmul.mubr.f32.gmra.mrb[0].mxu0 %v184
      %v345 = vpop.f32.mrb[0].mxu0
      %v346 = vadd.f32 %v227, %v345
      %v347 = vpop.f32.mrb[0].mxu0
      %348 = vmatprep.mubr.f32.mxu0 0.0
      %349 = vmatmul.mubr.f32.gmra.mrb[0].mxu0 %v185
      %v350 = vpop.f32.mrb[0].mxu0
      %v351 = vadd.f32 %v227, %v350
      %v352 = vpop.f32.mrb[0].mxu0
      %353 = vmatprep.mubr.f32.mxu0 0.0
      %354 = vmatmul.mubr.f32.gmra.mrb[0].mxu0 %v186
      %v355 = vpop.f32.mrb[0].mxu0
      %v356 = vadd.f32 %v227, %v355
      %v357 = vpop.f32.mrb[0].mxu0
      %358 = vmatprep.mubr.f32.mxu0 0.0
      %359 = vmatmul.mubr.f32.gmra.mrb[0].mxu0 %v187
      %v360 = vpop.f32.mrb[0].mxu0
      %v361 = vadd.f32 %v227, %v360
      %v362 = vpop.f32.mrb[0].mxu0
      %363 = vmatprep.mubr.f32.mxu0 0.0
      %364 = vmatmul.mubr.f32.gmra.mrb[0].mxu0 %v188
      %v365 = vpop.f32.mrb[0].mxu0
      %v366 = vadd.f32 %v227, %v365
      %v367 = vpop.f32.mrb[0].mxu0
      %368 = vmatprep.mubr.f32.mxu0 0.0
      %369 = vmatmul.mubr.f32.gmra.mrb[0].mxu0 %v189
      %v370 = vpop.f32.mrb[0].mxu0
      %v371 = vadd.f32 %v227, %v370
      %v372 = vpop.f32.mrb[0].mxu0
      %373 = vmatprep.mubr.f32.mxu0 0.0
      %374 = vmatmul.mubr.f32.gmra.mrb[0].mxu0 %v190
      %v375 = vpop.f32.mrb[0].mxu0
      %v376 = vadd.f32 %v227, %v375
      %v377 = vpop.f32.mrb[0].mxu0
      %378 = vmatprep.mubr.f32.mxu0 0.0
      %379 = vmatmul.mubr.f32.gmra.mrb[0].mxu0 %v191
      %v380 = vpop.f32.mrb[0].mxu0
      %v381 = vadd.f32 %v227, %v380
      %v382 = vpop.f32.mrb[0].mxu0
      %383 = vmatprep.mubr.f32.mxu0 0.0
      %384 = vmatmul.mubr.f32.gmra.mrb[0].mxu0 %v192
      %v385 = vpop.f32.mrb[0].mxu0
      %v386 = vadd.f32 %v227, %v385
      %v387 = vpop.f32.mrb[0].mxu0
      %388 = vmatprep.mubr.f32.mxu0 0.0
      %389 = vmatmul.mubr.f32.gmra.mrb[0].mxu0 %v193
      %v390 = vpop.f32.mrb[0].mxu0
      %v391 = vadd.f32 %v227, %v390
      %v392 = vpop.f32.mrb[0].mxu0
      %393 = vmatprep.mubr.f32.mxu0 0.0
      %394 = vmatmul.mubr.f32.gmra.mrb[0].mxu0 %v194
      %v395 = vpop.f32.mrb[0].mxu0
      %v396 = vadd.f32 %v227, %v395
      %v397 = vpop.f32.mrb[0].mxu0
      %398 = vmatprep.mubr.f32.mxu0 0.0
      %399 = vmatmul.mubr.f32.gmra.mrb[0].mxu0 %v195
      %v400 = vpop.f32.mrb[0].mxu0
      %v401 = vadd.f32 %v227, %v400
      %v402 = vpop.f32.mrb[0].mxu0
      %403 = vmatprep.mubr.f32.mxu0 0.0
      %404 = vmatmul.mubr.f32.gmra.mrb[0].mxu0 %v196
      %v405 = vpop.f32.mrb[0].mxu0
      %v406 = vadd.f32 %v227, %v405
      %v407 = vpop.f32.mrb[0].mxu0
      %408 = vmatprep.mubr.f32.mxu0 0.0
      %409 = vmatmul.mubr.f32.gmra.mrb[0].mxu0 %v197
      %v410 = vpop.f32.mrb[0].mxu0
      %v411 = vadd.f32 %v227, %v410
      %v412 = vpop.f32.mrb[0].mxu0
      %413 = vmatprep.mubr.f32.mxu0 0.0
      %414 = vmatmul.mubr.f32.gmra.mrb[0].mxu0 %v198
      %v415 = vpop.f32.mrb[0].mxu0
      %v416 = vadd.f32 %v227, %v415
      %v417 = vpop.f32.mrb[0].mxu0
      %418 = vmatprep.mubr.f32.mxu0 0.0
      %419 = vmatmul.mubr.f32.gmra.mrb[0].mxu0 %v199
      %v420 = vpop.f32.mrb[0].mxu0
      %v421 = vadd.f32 %v227, %v420
      %v422 = vpop.f32.mrb[0].mxu0
      %423 = vmatprep.mubr.f32.mxu0 0.0
      %424 = vmatmul.mubr.f32.gmra.mrb[0].mxu0 %v200
      %v425 = vpop.f32.mrb[0].mxu0
      %v426 = vadd.f32 %v227, %v425
      %v427 = vpop.f32.mrb[0].mxu0
      %428 = vmatprep.mubr.f32.mxu0 0.0
      %429 = vmatmul.mubr.f32.gmra.mrb[0].mxu0 %v201
      %v430 = vpop.f32.mrb[0].mxu0
      %v431 = vadd.f32 %v227, %v430
      %v432 = vpop.f32.mrb[0].mxu0
      %433 = vmatprep.mubr.f32.mxu0 0.0
      %434 = vmatmul.mubr.f32.gmra.mrb[0].mxu0 %v202
      %v435 = vpop.f32.mrb[0].mxu0
      %v436 = vadd.f32 %v227, %v435
      %v437 = vpop.f32.mrb[0].mxu0
      %438 = vmatprep.mubr.f32.mxu0 0.0
      %439 = vmatmul.mubr.f32.gmra.mrb[0].mxu0 %v203
      %v440 = vpop.f32.mrb[0].mxu0
      %v441 = vadd.f32 %v227, %v440
      %v442 = vpop.f32.mrb[0].mxu0
      %443 = vmatprep.mubr.f32.mxu0 0.0
      %444 = vmatmul.mubr.f32.gmra.mrb[0].mxu0 %v204
      %v445 = vpop.f32.mrb[0].mxu0
      %v446 = vadd.f32 %v227, %v445
      %v447 = vpop.f32.mrb[0].mxu0
      %448 = vmatprep.mubr.f32.mxu0 0.0
      %449 = vmatmul.mubr.f32.gmra.mrb[0].mxu0 %v205
      %v450 = vpop.f32.mrb[0].mxu0
      %v451 = vadd.f32 %v227, %v450
      %v452 = vpop.f32.mrb[0].mxu0
      %453 = vdwg.mxu0
      %454 = vst [vmem:[%s172] sm:$0xff] %v296
      %455 = vst [vmem:[%s172 + $0x8] sm:$0xff] %v301
      %456 = vst [vmem:[%s172 + $0x10] sm:$0xff] %v306
      %457 = vst [vmem:[%s172 + $0x18] sm:$0xff] %v311
      %458 = vst [vmem:[%s172 + $0x20] sm:$0xff] %v316
      %459 = vst [vmem:[%s172 + $0x28] sm:$0xff] %v321
      %460 = vst [vmem:[%s172 + $0x30] sm:$0xff] %v326
      %461 = vst [vmem:[%s172 + $0x38] sm:$0xff] %v331
      %462 = vst [vmem:[%s172 + $0x40] sm:$0xff] %v336
      %463 = vst [vmem:[%s172 + $0x48] sm:$0xff] %v341
      %464 = vst [vmem:[%s172 + $0x50] sm:$0xff] %v346
      %465 = vst [vmem:[%s172 + $0x58] sm:$0xff] %v351
      %466 = vst [vmem:[%s172 + $0x60] sm:$0xff] %v356
      %467 = vst [vmem:[%s172 + $0x68] sm:$0xff] %v361
      %468 = vst [vmem:[%s172 + $0x70] sm:$0xff] %v366
      %469 = vst [vmem:[%s172 + $0x78] sm:$0xff] %v371
      %470 = vst [vmem:[%s172 + $0x80] sm:$0xff] %v376
      %471 = vst [vmem:[%s172 + $0x88] sm:$0xff] %v381
      %472 = vst [vmem:[%s172 + $0x90] sm:$0xff] %v386
      %473 = vst [vmem:[%s172 + $0x98] sm:$0xff] %v391
      %474 = vst [vmem:[%s172 + $0xa0] sm:$0xff] %v396
      %475 = vst [vmem:[%s172 + $0xa8] sm:$0xff] %v401
      %476 = vst [vmem:[%s172 + $0xb0] sm:$0xff] %v406
      %477 = vst [vmem:[%s172 + $0xb8] sm:$0xff] %v411
      %478 = vst [vmem:[%s172 + $0xc0] sm:$0xff] %v416
      %479 = vst [vmem:[%s172 + $0xc8] sm:$0xff] %v421
      %480 = vst [vmem:[%s172 + $0xd0] sm:$0xff] %v426
      %481 = vst [vmem:[%s172 + $0xd8] sm:$0xff] %v431
      %482 = vst [vmem:[%s172 + $0xe0] sm:$0xff] %v436
      %483 = vst [vmem:[%s172 + $0xe8] sm:$0xff] %v441
      %484 = vst [vmem:[%s172 + $0xf0] sm:$0xff] %v446
      %485 = vst [vmem:[%s172 + $0xf8] sm:$0xff] %v451
      %s486 = smul.u32 32, %s14
      %p487 = scmp.lt.s32.totalorder %s486, 63
      %s488 = scalar_select %p487, %s486, 63
      %s489 = smul.addr %s488, 8
      %s490 = scalar_lea.vmem %s3, %s489
      // Predicated region
      $region33: #{complex_conv_transpose2d.1} parent=31 // pred_check
        %p491 = pneg %p100
      $region34: #{complex_conv_transpose2d.1} parent=31 // pred_check_branch
        %493 = sbr.rel (%p491) target = $region36
      $region35: #{complex_conv_transpose2d.1} parent=31 // pred_region
        %s494 = smul.u32 32, %s14
      $region36: #{complex_conv_transpose2d.1} parent=31 // pred_fallthru
        _
    $region32: #{complex_conv_transpose2d.1} parent=5 // pred_fallthru
      _
    %p495 = scmp.le.s32.totalorder 2, %s9
    // Predicated region
    $region37: #{complex_conv_transpose2d.1} parent=5 // pred_check
      %p496 = pneg %p495
    $region38: #{complex_conv_transpose2d.1} parent=5 // pred_check_branch
      %498 = sbr.rel (%p496) target = $region40
    $region39: #{complex_conv_transpose2d.1} parent=5 // pred_region
      %s499 = ssub.s32 %s9, 2
      // Predicated region
      $region41: #{complex_conv_transpose2d.1} parent=39 // pred_check
        %p500 = pneg %p106
      $region42: #{complex_conv_transpose2d.1} parent=39 // pred_check_branch
        %502 = sbr.rel (%p500) target = $region44
      $region43: #{complex_conv_transpose2d.1} parent=39 // pred_region
        %s503 = smul.u32 32, %s15
        %p504 = scmp.lt.s32.totalorder %s503, 63
        %s505 = scalar_select %p504, %s503, 63
        %s506 = smul.addr %s505, 8
        %s507 = scalar_lea.vmem %s3, %s506
      $region44: #{complex_conv_transpose2d.1} parent=39 // pred_fallthru
        _
    $region40: #{complex_conv_transpose2d.1} parent=5 // pred_fallthru
      _
  $region6: #{complex_conv_transpose2d.1} parent=0 // loop_footer
    %s13 = sadd.s32 1, %s9
  $region7: #{complex_conv_transpose2d.1} parent=0 // loop_footer_branch
    %8 = sbr.rel target = $region3
  $region8: #{complex_conv_transpose2d.1} parent=0 // loop_exit
    _

</llo_original>
